<compile_context>
chip_gen: v7x
topology: tpu7x:2x2x1
jax: 0.10.0
libtpu: 0.0.40
codegen_flags: <defaults>
</compile_context>

<pallas_src>
import functools
import math

import numpy as np
import jax
import jax.numpy as jnp
from jax.experimental import pallas as pl
from jax.experimental.pallas import tpu as pltpu


# ------------------------------- helpers ------------------------------------

def _physical_vmem_bytes():
    """Per-core physical VMEM (128 MiB on v5e/v6e, 64 MiB on v7x)."""
    default = 128 << 20
    try:
        info = pltpu.get_tpu_info()
        v = getattr(info, "vmem_capacity_bytes", None)
        if v:
            return int(v)
    except Exception:
        pass
    return default


def _vmem_limit(block_bytes, extra=0):
    """Scoped-VMEM limit: double-buffered pipeline blocks + in-kernel temporaries,
    capped at ~75% of physical VMEM (headroom for Mosaic internal scratch)."""
    cap = (_physical_vmem_bytes() * 3) // 4
    lim = 2 * block_bytes + extra + (8 << 20)
    return int(min(max(lim, 16 << 20), cap))


def _row_tile_max():
    # Bigger tiles on 128-MiB parts amortize the ~0.35us/step pipeline overhead.
    return 1024 if _physical_vmem_bytes() >= (96 << 20) else 512


def _q_tile_max():
    return 512 if _physical_vmem_bytes() >= (96 << 20) else 256


def _pick_tile(m, tmax, want_split=True):
    """Row-tile size: multiple of 8 (or full dim), <= tmax, and when `want_split`
    at least 2 grid steps so both v7x TensorCores get work."""
    if m > tmax:
        return tmax
    if not want_split or m <= 8:
        return m                              # full dim (always a legal block)
    half = -(-m // 2)                         # ceil(m/2)
    half = ((half + 7) // 8) * 8              # round up to a multiple of 8 sublanes
    return min(half, m)


# --------------------------- tiled linear kernel -----------------------------

def _linear_kernel(x_ref, w_ref, b_ref, o_ref, *, mxu_dtype, scale):
    # x: (tm, K), w: (K, N), b: (1, N) -> o: (tm, N)
    x = x_ref[...].astype(mxu_dtype)
    w = w_ref[...].astype(mxu_dtype)
    acc = jnp.dot(x, w, preferred_element_type=jnp.float32)
    acc = acc + b_ref[...].astype(jnp.float32)
    if scale != 1.0:
        acc = acc * scale
    o_ref[...] = acc.astype(o_ref.dtype)


def linear(x, w, b, mxu_dtype=jnp.bfloat16, out_dtype=None, scale=1.0,
           tm_max=None, want_split=True):
    """x: (M, K) @ w: (K, N) + b: (N,), optionally * scale. Tiled over M rows."""
    M, K = x.shape
    _, N = w.shape
    out_dtype = out_dtype or x.dtype
    tm_max = tm_max or _row_tile_max()
    tm = _pick_tile(M, tm_max, want_split)
    grid = (pl.cdiv(M, tm),)
    b2 = b.reshape(1, N)
    block_bytes = (tm * K * x.dtype.itemsize + (K * N + N) * w.dtype.itemsize
                   + tm * N * jnp.dtype(out_dtype).itemsize)
    return pl.pallas_call(
        functools.partial(_linear_kernel, mxu_dtype=mxu_dtype, scale=float(scale)),
        out_shape=jax.ShapeDtypeStruct((M, N), out_dtype),
        grid=grid,
        in_specs=[
            pl.BlockSpec((tm, K), lambda i: (i, 0)),
            pl.BlockSpec((K, N), lambda i: (0, 0)),
            pl.BlockSpec((1, N), lambda i: (0, 0)),
        ],
        out_specs=pl.BlockSpec((tm, N), lambda i: (i, 0)),
        compiler_params=pltpu.CompilerParams(
            dimension_semantics=("parallel",),
            vmem_limit_bytes=_vmem_limit(block_bytes)),
    )(x, w, b2)


# ----------------------- fused Q/K/V projection kernel -----------------------

def _qkv_proj_kernel(x_ref, wq_ref, bq_ref, wk_ref, bk_ref, wv_ref, bv_ref,
                     q_ref, k_ref, v_ref, *, mxu_dtype, q_scale):
    # One activation tile x: (tm, K) is read once and reused for all three projections.
    x = x_ref[...].astype(mxu_dtype)

    def _proj(w_ref, b_ref, o_ref, scale):
        acc = jnp.dot(x, w_ref[...].astype(mxu_dtype),
                      preferred_element_type=jnp.float32)
        acc = acc + b_ref[...].astype(jnp.float32)
        if scale != 1.0:
            acc = acc * scale                 # fold 1/sqrt(dk) into Q (f32, once)
        o_ref[...] = acc.astype(o_ref.dtype)

    _proj(wq_ref, bq_ref, q_ref, q_scale)
    _proj(wk_ref, bk_ref, k_ref, 1.0)
    _proj(wv_ref, bv_ref, v_ref, 1.0)


def qkv_projection(x, params, q_scale, mxu_dtype=jnp.bfloat16,
                   out_dtype=jnp.bfloat16, tm_max=None):
    """Fused Q/K/V projection for self-attention: x (M, d_model) -> three bf16 (M, N_*)."""
    M, K = x.shape
    Nq = params["wq"].shape[1]
    Nk = params["wk"].shape[1]
    Nv = params["wv"].shape[1]
    tm_max = tm_max or _row_tile_max()
    tm = _pick_tile(M, tm_max, want_split=True)
    grid = (pl.cdiv(M, tm),)
    bq = params["bq"].reshape(1, Nq)
    bk = params["bk"].reshape(1, Nk)
    bv = params["bv"].reshape(1, Nv)
    ob = jnp.dtype(out_dtype).itemsize
    wb = params["wq"].dtype.itemsize
    block_bytes = (tm * K * x.dtype.itemsize
                   + (K + 1) * (Nq + Nk + Nv) * wb
                   + tm * (Nq + Nk + Nv) * ob)
    return pl.pallas_call(
        functools.partial(_qkv_proj_kernel, mxu_dtype=mxu_dtype,
                          q_scale=float(q_scale)),
        out_shape=(jax.ShapeDtypeStruct((M, Nq), out_dtype),
                   jax.ShapeDtypeStruct((M, Nk), out_dtype),
                   jax.ShapeDtypeStruct((M, Nv), out_dtype)),
        grid=grid,
        in_specs=[
            pl.BlockSpec((tm, K), lambda i: (i, 0)),
            pl.BlockSpec((K, Nq), lambda i: (0, 0)),
            pl.BlockSpec((1, Nq), lambda i: (0, 0)),
            pl.BlockSpec((K, Nk), lambda i: (0, 0)),
            pl.BlockSpec((1, Nk), lambda i: (0, 0)),
            pl.BlockSpec((K, Nv), lambda i: (0, 0)),
            pl.BlockSpec((1, Nv), lambda i: (0, 0)),
        ],
        out_specs=(pl.BlockSpec((tm, Nq), lambda i: (i, 0)),
                   pl.BlockSpec((tm, Nk), lambda i: (i, 0)),
                   pl.BlockSpec((tm, Nv), lambda i: (i, 0))),
        compiler_params=pltpu.CompilerParams(
            dimension_semantics=("parallel",),
            vmem_limit_bytes=_vmem_limit(block_bytes)),
    )(x, params["wq"], bq, params["wk"], bk, params["wv"], bv)


# ------------- multi-head attention + fused output projection ----------------

def _mha_out_kernel(q_ref, k_ref, v_ref, wo_ref, bo_ref, o_ref,
                    *, n_heads, d_keys, d_values, mxu_dtype):
    # q: (1, tq, H*dk), k: (1, Lk, H*dk), v: (1, Lk, H*dv),
    # wo: (H*dv, d_model), bo: (1, d_model) -> o: (1, tq, d_model)
    q = q_ref[0]                                   # bf16, 1/sqrt(dk) already folded in
    k = k_ref[0]
    v = v_ref[0]
    wo = wo_ref[...].astype(mxu_dtype)

    tq = q.shape[0]
    d_model = o_ref.shape[-1]
    acc = jnp.zeros((tq, d_model), jnp.float32)

    # Static unroll over heads; out-projection partial sums accumulated in f32 so the
    # only store is one lane-dense (tq, d_model) tile.
    # TODO(synk): for very large H consider a head-batched dot_general layout instead.
    for h in range(n_heads):
        qh = q[:, h * d_keys:(h + 1) * d_keys]
        kh = k[:, h * d_keys:(h + 1) * d_keys]
        vh = v[:, h * d_values:(h + 1) * d_values]

        # scores = (q * 1/sqrt(dk)) @ k^T  (contract last dims; MXU, f32 accumulation)
        s = jax.lax.dot_general(qh, kh, (((1,), (1,)), ((), ())),
                                preferred_element_type=jnp.float32)
        # f32 softmax over the key axis (VPU max/exp/sum, EUP reciprocal)
        m = jnp.max(s, axis=-1, keepdims=True)
        p = jnp.exp(s - m)
        denom = jnp.sum(p, axis=-1, keepdims=True)
        a = p * pl.reciprocal(denom, approx=True)

        oh = jnp.dot(a.astype(mxu_dtype), vh, preferred_element_type=jnp.float32)
        # fused output projection: out += o_h @ wo[h*dv:(h+1)*dv, :]
        acc = acc + jnp.dot(oh.astype(mxu_dtype),
                            wo[h * d_values:(h + 1) * d_values, :],
                            preferred_element_type=jnp.float32)

    o_ref[0] = (acc + bo_ref[...].astype(jnp.float32)).astype(o_ref.dtype)


def mha_out_proj(q, k, v, wo, bo, n_heads, d_keys, d_values, out_dtype,
                 mxu_dtype=jnp.bfloat16, tq_max=None):
    """q: (B, Lq, H*dk), k: (B, Lk, H*dk), v: (B, Lk, H*dv) -> (B, Lq, d_model),
    with the output projection fused into the attention epilogue."""
    B, Lq, HK = q.shape
    _, Lk, HV = v.shape
    d_model = wo.shape[1]
    tq_max = tq_max or _q_tile_max()
    tq = _pick_tile(Lq, tq_max, want_split=(B < 2))   # B>=2 already feeds both TCs
    grid = (B, pl.cdiv(Lq, tq))
    bo2 = bo.reshape(1, d_model)

    eb = q.dtype.itemsize
    block_bytes = ((tq * HK + Lk * HK + Lk * HV) * eb
                   + (HV + 1) * d_model * wo.dtype.itemsize
                   + tq * d_model * jnp.dtype(out_dtype).itemsize)
    # Static head loop does not bound live ranges: budget H concurrent score/prob bufs.
    score_bytes = 2 * n_heads * tq * Lk * 4 + n_heads * tq * max(d_values, d_model) * 4
    # TODO(synk): for very long Lk (e.g. v7x with 64 MiB VMEM) add a flash-style Lk grid
    # axis ("arbitrary") with running m/l/acc scratch instead of full (tq, Lk) scores.
    return pl.pallas_call(
        functools.partial(_mha_out_kernel, n_heads=n_heads, d_keys=d_keys,
                          d_values=d_values, mxu_dtype=mxu_dtype),
        out_shape=jax.ShapeDtypeStruct((B, Lq, d_model), out_dtype),
        grid=grid,
        in_specs=[
            pl.BlockSpec((1, tq, HK), lambda b, i: (b, i, 0)),
            pl.BlockSpec((1, Lk, HK), lambda b, i: (b, 0, 0)),
            pl.BlockSpec((1, Lk, HV), lambda b, i: (b, 0, 0)),
            pl.BlockSpec((HV, d_model), lambda b, i: (0, 0)),
            pl.BlockSpec((1, d_model), lambda b, i: (0, 0)),
        ],
        out_specs=pl.BlockSpec((1, tq, d_model), lambda b, i: (b, i, 0)),
        compiler_params=pltpu.CompilerParams(
            dimension_semantics=("parallel", "parallel"),
            vmem_limit_bytes=_vmem_limit(block_bytes, extra=score_bytes)),
    )(q, k, v, wo, bo2)


# --------------------------- module forward (glue) ---------------------------

def init_params(key, d_model, n_heads, d_keys=None, d_values=None, dtype=jnp.float32):
    d_keys = d_keys or d_model // n_heads
    d_values = d_values or d_model // n_heads
    ks = jax.random.split(key, 8)

    def lin(kw, kb, fan_in, fan_out):
        bound = 1.0 / math.sqrt(fan_in)
        w = jax.random.uniform(kw, (fan_in, fan_out), dtype, -bound, bound)
        b = jax.random.uniform(kb, (fan_out,), dtype, -bound, bound)
        return w, b

    wq, bq = lin(ks[0], ks[1], d_model, d_keys * n_heads)
    wk, bk = lin(ks[2], ks[3], d_model, d_keys * n_heads)
    wv, bv = lin(ks[4], ks[5], d_model, d_values * n_heads)
    wo, bo = lin(ks[6], ks[7], d_values * n_heads, d_model)
    return dict(wq=wq, bq=bq, wk=wk, bk=bk, wv=wv, bv=bv, wo=wo, bo=bo)


def multi_scale_attention_layer(params, queries, keys, values, attn_mask,
                                n_heads, factor, mxu_dtype=jnp.bfloat16,
                                self_attention=None):
    """queries/keys/values: (B, L, d_model). Returns ((B, L_q, d_model), attn)."""
    del attn_mask  # inner attention has mask_flag=False
    B, Lq, d_model = queries.shape
    _, Lk, _ = keys.shape
    H = n_heads
    dk = params["wq"].shape[1] // H
    dv = params["wv"].shape[1] // H
    q_scale = 1.0 / math.sqrt(dk)

    # Multi-scale bookkeeping (same values as the reference).  Guard the log-of-zero
    # case (original would crash when L_min < 2 * factor is not satisfied).
    L_min = min(Lq, Lk)
    ratio = max(L_min // factor, 1)
    scale_num = math.floor(math.log2(ratio)) + 1
    scale_weight = np.array([1.0 / 2 ** i for i in range(scale_num)], dtype=np.float64)
    scale_weight = scale_weight / scale_weight.sum()
    assert abs(float(scale_weight.sum()) - 1.0) < 1e-9

    # Under jax.jit queries/keys/values are distinct tracers even for self-attention;
    # pass self_attention=True explicitly there so the fused QKV path is taken.
    if self_attention is None:
        self_attention = (queries is keys) and (keys is values)

    # Projections (Pallas kernels).  bf16 intermediates; 1/sqrt(dk) folded into Q.
    if self_attention:
        q2, k2, v2 = qkv_projection(queries.reshape(B * Lq, d_model), params,
                                    q_scale, mxu_dtype)
    else:
        q2 = linear(queries.reshape(B * Lq, d_model), params["wq"], params["bq"],
                    mxu_dtype=mxu_dtype, out_dtype=mxu_dtype, scale=q_scale)
        k2 = linear(keys.reshape(B * Lk, d_model), params["wk"], params["bk"],
                    mxu_dtype=mxu_dtype, out_dtype=mxu_dtype)
        v2 = linear(values.reshape(B * Lk, d_model), params["wv"], params["bv"],
                    mxu_dtype=mxu_dtype, out_dtype=mxu_dtype)

    # Free reshapes (leading-dim split only): keep the lane-dense (.., H*d) layout so the
    # attention kernel needs no JAX-level transposes.
    q3 = q2.reshape(B, Lq, H * dk)
    k3 = k2.reshape(B, Lk, H * dk)
    v3 = v2.reshape(B, Lk, H * dv)

    # Attention with the output projection fused into the kernel epilogue.
    # Multi-scale weighted sum: with FullAttention semantics every scale yields the same
    # tensor and scale_weight sums to 1, so the sum is exactly the single-scale output.
    # See TODO(synk) in the header for custom inner attentions.
    y = mha_out_proj(q3, k3, v3, params["wo"], params["bo"], H, dk, dv,
                     out_dtype=queries.dtype, mxu_dtype=mxu_dtype)

    attn = None  # inner attention has output_attention=False
    return y, attn


# ----------------------------- pure-JAX reference ----------------------------

def reference_forward(params, queries, keys, values, n_heads, factor):
    B, Lq, d_model = queries.shape
    _, Lk, _ = keys.shape
    H = n_heads
    dk = params["wq"].shape[1] // H
    dv = params["wv"].shape[1] // H
    q = (queries @ params["wq"] + params["bq"]).reshape(B, Lq, H, dk)
    k = (keys @ params["wk"] + params["bk"]).reshape(B, Lk, H, dk)
    v = (values @ params["wv"] + params["bv"]).reshape(B, Lk, H, dv)
    scale = 1.0 / math.sqrt(dk)
    s = jnp.einsum("blhe,bshe->bhls", q, k) * scale
    a = jax.nn.softmax(s, axis=-1)
    o = jnp.einsum("bhls,bshd->blhd", a, v).reshape(B, Lq, H * dv)
    # multi-scale weighted sum is the identity (weights sum to 1, identical scales)
    return o @ params["wo"] + params["bo"]


# ---------------------------------- main -------------------------------------

if __name__ == "__main__":
    B, L, d_model, n_heads, factor = 2, 16, 32, 4, 2

    key = jax.random.PRNGKey(0)
    kp, kx = jax.random.split(key, 2)
    params = init_params(kp, d_model, n_heads)
    x = jax.random.normal(kx, (B, L, d_model), jnp.float32)
    attn_mask = None  # mask_flag=False inner attention

    y, attn = multi_scale_attention_layer(params, x, x, x, attn_mask, n_heads, factor,
                                          self_attention=True)
    y = jax.block_until_ready(y)

    assert y.shape == (B, L, d_model)
    assert bool(jnp.all(jnp.isfinite(y)))

    y_ref = reference_forward(params, x, x, x, n_heads, factor)
    err = float(jnp.max(jnp.abs(y - y_ref)))
    assert err < 5e-2, f"max abs error vs reference: {err}"

    print("KERNEL_OK")
</pallas_src>

<mosaic_0001>
module attributes {stable_mosaic.version = 11 : i64} {
  func.func @_qkv_proj_kernel(%arg0: i32, %arg1: memref<16x32xf32, #tpu.memory_space<vmem>>, %arg2: memref<32x32xf32, #tpu.memory_space<vmem>>, %arg3: memref<1x32xf32, #tpu.memory_space<vmem>>, %arg4: memref<32x32xf32, #tpu.memory_space<vmem>>, %arg5: memref<1x32xf32, #tpu.memory_space<vmem>>, %arg6: memref<32x32xf32, #tpu.memory_space<vmem>>, %arg7: memref<1x32xf32, #tpu.memory_space<vmem>>, %arg8: memref<16x32xbf16, #tpu.memory_space<vmem>>, %arg9: memref<16x32xbf16, #tpu.memory_space<vmem>>, %arg10: memref<16x32xbf16, #tpu.memory_space<vmem>>) attributes {dimension_semantics = [#tpu.dimension_semantics<parallel>], iteration_bounds = array<i64: 2>, scalar_prefetch = 0 : i64, scratch_operands = 0 : i64, tpu.core_type = #tpu.core_type<tc>, window_params = [{transform_indices = @transform_0, window_bounds = array<i64: 16, 32>}, {pipeline_mode = #tpu.pipeline_mode<synchronous>, transform_indices = @transform_1, window_bounds = array<i64: 32, 32>}, {pipeline_mode = #tpu.pipeline_mode<synchronous>, transform_indices = @transform_2, window_bounds = array<i64: 1, 32>}, {pipeline_mode = #tpu.pipeline_mode<synchronous>, transform_indices = @transform_3, window_bounds = array<i64: 32, 32>}, {pipeline_mode = #tpu.pipeline_mode<synchronous>, transform_indices = @transform_4, window_bounds = array<i64: 1, 32>}, {pipeline_mode = #tpu.pipeline_mode<synchronous>, transform_indices = @transform_5, window_bounds = array<i64: 32, 32>}, {pipeline_mode = #tpu.pipeline_mode<synchronous>, transform_indices = @transform_6, window_bounds = array<i64: 1, 32>}, {transform_indices = @transform_7, window_bounds = array<i64: 16, 32>}, {transform_indices = @transform_8, window_bounds = array<i64: 16, 32>}, {transform_indices = @transform_9, window_bounds = array<i64: 16, 32>}]} {
    %c0 = arith.constant 0 : index
    %c0_0 = arith.constant 0 : index
    %0 = vector.load %arg1[%c0, %c0_0] : memref<16x32xf32, #tpu.memory_space<vmem>>, vector<16x32xf32>
    %1 = arith.truncf %0 : vector<16x32xf32> to vector<16x32xbf16>
    %c0_1 = arith.constant 0 : index
    %c0_2 = arith.constant 0 : index
    %2 = vector.load %arg2[%c0_1, %c0_2] : memref<32x32xf32, #tpu.memory_space<vmem>>, vector<32x32xf32>
    %3 = arith.truncf %2 : vector<32x32xf32> to vector<32x32xbf16>
    %cst = arith.constant dense<0.000000e+00> : vector<16x32xf32>
    %4 = tpu.matmul %1, %3, %cst {dimension_numbers = #tpu.dot_dimension_numbers<[1], [0], [0], [1], [0, 0, 1, 1], [], []>} : vector<16x32xbf16>, vector<32x32xbf16>, vector<16x32xf32> -> vector<16x32xf32>
    %c0_3 = arith.constant 0 : index
    %c0_4 = arith.constant 0 : index
    %5 = vector.load %arg3[%c0_3, %c0_4] : memref<1x32xf32, #tpu.memory_space<vmem>>, vector<1x32xf32>
    %6 = vector.broadcast %5 : vector<1x32xf32> to vector<16x32xf32>
    %7 = arith.addf %4, %6 : vector<16x32xf32>
    %cst_5 = arith.constant 0.353553385 : f32
    %8 = vector.broadcast %cst_5 : f32 to vector<16x32xf32>
    %9 = arith.mulf %7, %8 : vector<16x32xf32>
    %10 = arith.truncf %9 : vector<16x32xf32> to vector<16x32xbf16>
    %c0_6 = arith.constant 0 : index
    %c0_7 = arith.constant 0 : index
    %11 = vector.load %arg8[%c0_6, %c0_7] : memref<16x32xbf16, #tpu.memory_space<vmem>>, vector<16x32xbf16>
    tpu.vector_store %arg8[%c0_6, %c0_7], %10 {strides = array<i32>} : memref<16x32xbf16, #tpu.memory_space<vmem>>, vector<16x32xbf16>,
    %c0_8 = arith.constant 0 : index
    %c0_9 = arith.constant 0 : index
    %12 = vector.load %arg4[%c0_8, %c0_9] : memref<32x32xf32, #tpu.memory_space<vmem>>, vector<32x32xf32>
    %13 = arith.truncf %12 : vector<32x32xf32> to vector<32x32xbf16>
    %cst_10 = arith.constant dense<0.000000e+00> : vector<16x32xf32>
    %14 = tpu.matmul %1, %13, %cst_10 {dimension_numbers = #tpu.dot_dimension_numbers<[1], [0], [0], [1], [0, 0, 1, 1], [], []>} : vector<16x32xbf16>, vector<32x32xbf16>, vector<16x32xf32> -> vector<16x32xf32>
    %c0_11 = arith.constant 0 : index
    %c0_12 = arith.constant 0 : index
    %15 = vector.load %arg5[%c0_11, %c0_12] : memref<1x32xf32, #tpu.memory_space<vmem>>, vector<1x32xf32>
    %16 = vector.broadcast %15 : vector<1x32xf32> to vector<16x32xf32>
    %17 = arith.addf %14, %16 : vector<16x32xf32>
    %18 = arith.truncf %17 : vector<16x32xf32> to vector<16x32xbf16>
    %c0_13 = arith.constant 0 : index
    %c0_14 = arith.constant 0 : index
    %19 = vector.load %arg9[%c0_13, %c0_14] : memref<16x32xbf16, #tpu.memory_space<vmem>>, vector<16x32xbf16>
    tpu.vector_store %arg9[%c0_13, %c0_14], %18 {strides = array<i32>} : memref<16x32xbf16, #tpu.memory_space<vmem>>, vector<16x32xbf16>,
    %c0_15 = arith.constant 0 : index
    %c0_16 = arith.constant 0 : index
    %20 = vector.load %arg6[%c0_15, %c0_16] : memref<32x32xf32, #tpu.memory_space<vmem>>, vector<32x32xf32>
    %21 = arith.truncf %20 : vector<32x32xf32> to vector<32x32xbf16>
    %cst_17 = arith.constant dense<0.000000e+00> : vector<16x32xf32>
    %22 = tpu.matmul %1, %21, %cst_17 {dimension_numbers = #tpu.dot_dimension_numbers<[1], [0], [0], [1], [0, 0, 1, 1], [], []>} : vector<16x32xbf16>, vector<32x32xbf16>, vector<16x32xf32> -> vector<16x32xf32>
    %c0_18 = arith.constant 0 : index
    %c0_19 = arith.constant 0 : index
    %23 = vector.load %arg7[%c0_18, %c0_19] : memref<1x32xf32, #tpu.memory_space<vmem>>, vector<1x32xf32>
    %24 = vector.broadcast %23 : vector<1x32xf32> to vector<16x32xf32>
    %25 = arith.addf %22, %24 : vector<16x32xf32>
    %26 = arith.truncf %25 : vector<16x32xf32> to vector<16x32xbf16>
    %c0_20 = arith.constant 0 : index
    %c0_21 = arith.constant 0 : index
    %27 = vector.load %arg10[%c0_20, %c0_21] : memref<16x32xbf16, #tpu.memory_space<vmem>>, vector<16x32xbf16>
    tpu.vector_store %arg10[%c0_20, %c0_21], %26 {strides = array<i32>} : memref<16x32xbf16, #tpu.memory_space<vmem>>, vector<16x32xbf16>,
    return
  }
  func.func @transform_0(%arg0: i32) -> (i32, i32) {
    %c0_i32 = arith.constant 0 : i32
    %c0_i32_0 = arith.constant 0 : i32
    return %arg0, %c0_i32 : i32, i32
  }
  func.func @transform_1(%arg0: i32) -> (i32, i32) {
    %c0_i32 = arith.constant 0 : i32
    %c0_i32_0 = arith.constant 0 : i32
    %c0_i32_1 = arith.constant 0 : i32
    return %c0_i32, %c0_i32_0 : i32, i32
  }
  func.func @transform_2(%arg0: i32) -> (i32, i32) {
    %c0_i32 = arith.constant 0 : i32
    %c0_i32_0 = arith.constant 0 : i32
    %c0_i32_1 = arith.constant 0 : i32
    return %c0_i32, %c0_i32_0 : i32, i32
  }
  func.func @transform_3(%arg0: i32) -> (i32, i32) {
    %c0_i32 = arith.constant 0 : i32
    %c0_i32_0 = arith.constant 0 : i32
    %c0_i32_1 = arith.constant 0 : i32
    return %c0_i32, %c0_i32_0 : i32, i32
  }
  func.func @transform_4(%arg0: i32) -> (i32, i32) {
    %c0_i32 = arith.constant 0 : i32
    %c0_i32_0 = arith.constant 0 : i32
    %c0_i32_1 = arith.constant 0 : i32
    return %c0_i32, %c0_i32_0 : i32, i32
  }
  func.func @transform_5(%arg0: i32) -> (i32, i32) {
    %c0_i32 = arith.constant 0 : i32
    %c0_i32_0 = arith.constant 0 : i32
    %c0_i32_1 = arith.constant 0 : i32
    return %c0_i32, %c0_i32_0 : i32, i32
  }
  func.func @transform_6(%arg0: i32) -> (i32, i32) {
    %c0_i32 = arith.constant 0 : i32
    %c0_i32_0 = arith.constant 0 : i32
    %c0_i32_1 = arith.constant 0 : i32
    return %c0_i32, %c0_i32_0 : i32, i32
  }
  func.func @transform_7(%arg0: i32) -> (i32, i32) {
    %c0_i32 = arith.constant 0 : i32
    %c0_i32_0 = arith.constant 0 : i32
    return %arg0, %c0_i32 : i32, i32
  }
  func.func @transform_8(%arg0: i32) -> (i32, i32) {
    %c0_i32 = arith.constant 0 : i32
    %c0_i32_0 = arith.constant 0 : i32
    return %arg0, %c0_i32 : i32, i32
  }
  func.func @transform_9(%arg0: i32) -> (i32, i32) {
    %c0_i32 = arith.constant 0 : i32
    %c0_i32_0 = arith.constant 0 : i32
    return %arg0, %c0_i32 : i32, i32
  }
}

</mosaic_0001>

<llo_original>
// kernel: tpu_custom_call.1
$region0: #{tpu_custom_call.1}
  #allocation0 [shape = 'u32[]', space=smem, size = 0x4, offset = 0x4, fixed_abs, tag = 'smem constant byte address 0x4 - core index']
  #allocation1 [shape = 'u32[144,128]{1,0:T(1,128)}', space=vmem, size = 0x12000, scoped, tag = 'internal scratch']
  %s0 = inlined_call_operand.hbm [shape: f32[32,32], index: 0, kind: input, shape index: {}]
  %s1 = inlined_call_operand.hbm [shape: f32[32,32], index: 1, kind: input, shape index: {}]
  %s2 = inlined_call_operand.vmem [shape: f32[1,32], index: 2, kind: input, shape index: {}]
  %s3 = inlined_call_operand.hbm [shape: f32[32,32], index: 3, kind: input, shape index: {}]
  %s4 = inlined_call_operand.vmem [shape: f32[1,32], index: 4, kind: input, shape index: {}]
  %s5 = inlined_call_operand.hbm [shape: f32[32,32], index: 5, kind: input, shape index: {}]
  %s6 = inlined_call_operand.vmem [shape: f32[1,32], index: 6, kind: input, shape index: {}]
  %s7 = inlined_call_operand.hbm [shape: bf16[32,32], index: 7, kind: output, shape index: {0}]
  %s8 = inlined_call_operand.hbm [shape: bf16[32,32], index: 8, kind: output, shape index: {1}]
  %s9 = inlined_call_operand.hbm [shape: bf16[32,32], index: 9, kind: output, shape index: {2}]
  %10 = xla_tuple %s7, %s8, %s9
  %s11 = sld [smem:[#allocation0]]
  $region93: #{tpu_custom_call.1} parent=0
    _
  %s13 = ssub.s32 1, %s11
  %s14 = scalar_select 0, %s13, %s11
  $region1: #{tpu_custom_call.1} parent=0
    #allocation2 [shape = 'u8[16384]{0}', space=vmem, size = 0x4000, scoped, tag = 'input window, operand 0']
    #allocation3 [shape = 's32[2]{0}', space=sflag, size = 0x8, scoped, tag = 'scoped memory for tpu_custom_call.1']
    #allocation4 [shape = 's32[2]{0}', space=sflag, size = 0x8, scoped, tag = 'scoped memory for tpu_custom_call.1']
    #allocation5 [shape = 'u8[16384]{0}', space=vmem, size = 0x4000, scoped, tag = 'input window, operand 1, single buffered']
    #allocation6 [shape = 's32[1]{0}', space=sflag, size = 0x4, scoped, tag = 'scoped memory for tpu_custom_call.1']
    #allocation7 [shape = 'u8[16384]{0}', space=vmem, size = 0x4000, scoped, tag = 'input window, operand 3, single buffered']
    #allocation8 [shape = 'u8[16384]{0}', space=vmem, size = 0x4000, scoped, tag = 'input window, operand 5, single buffered']
    #allocation9 [shape = 's32[1]{0}', space=sflag, size = 0x4, scoped, tag = 'scoped memory for tpu_custom_call.1']
    #allocation10 [shape = 'u8[8192]{0}', space=vmem, size = 0x2000, scoped, tag = 'output window, operand 0']
    #allocation11 [shape = 'u8[8192]{0}', space=vmem, size = 0x2000, scoped, tag = 'output window, operand 1']
    #allocation12 [shape = 's32[2]{0}', space=sflag, size = 0x8, scoped, tag = 'scoped memory for tpu_custom_call.1']
    #allocation13 [shape = 'u8[8192]{0}', space=vmem, size = 0x2000, scoped, tag = 'output window, operand 2']
    %15 = vsyncpa [#allocation3], 0
    %s16 = scalar_lea.sflag [#allocation3], 1
    %17 = vsyncpa %s16, 0
    %18 = vsyncpa [#allocation6], 0
    %19 = vsyncpa [#allocation9], 0
    %20 = vsyncpa [#allocation4], 0
    %s21 = scalar_lea.sflag [#allocation4], 1
    %22 = vsyncpa %s21, 0
    %23 = vsyncpa [#allocation12], 0
    %s24 = scalar_lea.sflag [#allocation12], 1
    %25 = vsyncpa %s24, 0
    loop: start=0, step=1, limit=4
    $region2: #{tpu_custom_call.1} parent=1 // loop_pre_header
      _
    $region3: #{tpu_custom_call.1} parent=1 // loop_header
      %s27 = sphi 0, %s31
      %p28 = scmp.ge.s32.totalorder %s27, 4
      %s37 = sphi 0, %s39
      %s40 = sphi 0, %s37
      %s41 = sphi 0, %s40
      %s57 = sphi 0, %s41
      %s61 = sphi 0, %s61
      %s63 = sphi 0, %s61
      %s64 = sphi 0, %s63
      %s78 = sphi 0, %s64
      %s82 = sphi 0, %s82
      %s84 = sphi 0, %s82
      %s85 = sphi 0, %s84
      %s99 = sphi 0, %s85
      %s103 = sphi 0, %s103
      %s105 = sphi 0, %s103
      %s106 = sphi 0, %s105
      %s120 = sphi 0, %s106
      %s124 = sphi 0, %s124
      %s126 = sphi 0, %s124
      %s127 = sphi 0, %s126
      %s141 = sphi 0, %s127
      %s145 = sphi 0, %s145
      %s147 = sphi 0, %s145
      %s148 = sphi 0, %s147
      %s162 = sphi 0, %s148
      %s166 = sphi 0, %s166
      %s168 = sphi 0, %s166
      %s169 = sphi 0, %s168
      %s183 = sphi 0, %s169
      %s189 = sphi 0, %s191
      %s192 = sphi 0, %s189
      %s193 = sphi 0, %s192
      %s209 = sphi 0, %s193
      %s215 = sphi 0, %s217
      %s218 = sphi 0, %s215
      %s219 = sphi 0, %s218
      %s235 = sphi 0, %s219
      %s241 = sphi 0, %s243
      %s244 = sphi 0, %s241
      %s245 = sphi 0, %s244
      %s261 = sphi 0, %s245
    $region4: #{tpu_custom_call.1} parent=1 // loop_header_branch
      %30 = sbr.rel (%p28) target = $region8
    $region5: #{tpu_custom_call.1} parent=1 // loop_body
      %s32 = ssub.s32 %s27, 1
      %s33 = ssub.s32 %s27, 2
      %s34 = sadd.s32 %s27, 1
      %s35 = ssub.s32 %s27, %s34
      %p36 = scmp.eq.s32.totalorder %s35, 0
      %s38 = sadd.s32 %s37, 1
      %s39 = scalar_select %p36, %s37, %s38
      %p42 = pneg %p36
      %p43 = scmp.eq.s32.totalorder %s27, 1
      %p44 = por %p42, %p43
      %p45 = scmp.ne.s32.totalorder %s37, %s40
      %p46 = scmp.eq.s32.totalorder %s27, 0
      %p47 = por %p45, %p46
      %p48 = scmp.ne.s32.totalorder %s37, %s40
      %p49 = scmp.eq.s32.totalorder %s32, 1
      %p50 = por %p48, %p49
      %p51 = scmp.ne.s32.totalorder %s40, %s41
      %p52 = scmp.eq.s32.totalorder %s32, 0
      %p53 = por %p51, %p52
      %p54 = scmp.ne.s32.totalorder %s40, %s41
      %p55 = scmp.eq.s32.totalorder %s33, 1
      %p56 = por %p54, %p55
      %p58 = scmp.ne.s32.totalorder %s41, %s57
      %p59 = scmp.eq.s32.totalorder %s33, 0
      %p60 = por %p58, %p59
      %s62 = sadd.s32 %s61, 1
      %p65 = scmp.eq.s32.totalorder %s27, 1
      %p66 = scmp.ne.s32.totalorder %s61, %s63
      %p67 = scmp.eq.s32.totalorder %s27, 0
      %p68 = por %p66, %p67
      %p69 = scmp.ne.s32.totalorder %s61, %s63
      %p70 = scmp.eq.s32.totalorder %s32, 1
      %p71 = por %p69, %p70
      %p72 = scmp.ne.s32.totalorder %s63, %s64
      %p73 = scmp.eq.s32.totalorder %s32, 0
      %p74 = por %p72, %p73
      %p75 = scmp.ne.s32.totalorder %s63, %s64
      %p76 = scmp.eq.s32.totalorder %s33, 1
      %p77 = por %p75, %p76
      %p79 = scmp.ne.s32.totalorder %s64, %s78
      %p80 = scmp.eq.s32.totalorder %s33, 0
      %p81 = por %p79, %p80
      %s83 = sadd.s32 %s82, 1
      %p86 = scmp.eq.s32.totalorder %s27, 1
      %p87 = scmp.ne.s32.totalorder %s82, %s84
      %p88 = scmp.eq.s32.totalorder %s27, 0
      %p89 = por %p87, %p88
      %p90 = scmp.ne.s32.totalorder %s82, %s84
      %p91 = scmp.eq.s32.totalorder %s32, 1
      %p92 = por %p90, %p91
      %p93 = scmp.ne.s32.totalorder %s84, %s85
      %p94 = scmp.eq.s32.totalorder %s32, 0
      %p95 = por %p93, %p94
      %p96 = scmp.ne.s32.totalorder %s84, %s85
      %p97 = scmp.eq.s32.totalorder %s33, 1
      %p98 = por %p96, %p97
      %p100 = scmp.ne.s32.totalorder %s85, %s99
      %p101 = scmp.eq.s32.totalorder %s33, 0
      %p102 = por %p100, %p101
      %s104 = sadd.s32 %s103, 1
      %p107 = scmp.eq.s32.totalorder %s27, 1
      %p108 = scmp.ne.s32.totalorder %s103, %s105
      %p109 = scmp.eq.s32.totalorder %s27, 0
      %p110 = por %p108, %p109
      %p111 = scmp.ne.s32.totalorder %s103, %s105
      %p112 = scmp.eq.s32.totalorder %s32, 1
      %p113 = por %p111, %p112
      %p114 = scmp.ne.s32.totalorder %s105, %s106
      %p115 = scmp.eq.s32.totalorder %s32, 0
      %p116 = por %p114, %p115
      %p117 = scmp.ne.s32.totalorder %s105, %s106
      %p118 = scmp.eq.s32.totalorder %s33, 1
      %p119 = por %p117, %p118
      %p121 = scmp.ne.s32.totalorder %s106, %s120
      %p122 = scmp.eq.s32.totalorder %s33, 0
      %p123 = por %p121, %p122
      %s125 = sadd.s32 %s124, 1
      %p128 = scmp.eq.s32.totalorder %s27, 1
      %p129 = scmp.ne.s32.totalorder %s124, %s126
      %p130 = scmp.eq.s32.totalorder %s27, 0
      %p131 = por %p129, %p130
      %p132 = scmp.ne.s32.totalorder %s124, %s126
      %p133 = scmp.eq.s32.totalorder %s32, 1
      %p134 = por %p132, %p133
      %p135 = scmp.ne.s32.totalorder %s126, %s127
      %p136 = scmp.eq.s32.totalorder %s32, 0
      %p137 = por %p135, %p136
      %p138 = scmp.ne.s32.totalorder %s126, %s127
      %p139 = scmp.eq.s32.totalorder %s33, 1
      %p140 = por %p138, %p139
      %p142 = scmp.ne.s32.totalorder %s127, %s141
      %p143 = scmp.eq.s32.totalorder %s33, 0
      %p144 = por %p142, %p143
      %s146 = sadd.s32 %s145, 1
      %p149 = scmp.eq.s32.totalorder %s27, 1
      %p150 = scmp.ne.s32.totalorder %s145, %s147
      %p151 = scmp.eq.s32.totalorder %s27, 0
      %p152 = por %p150, %p151
      %p153 = scmp.ne.s32.totalorder %s145, %s147
      %p154 = scmp.eq.s32.totalorder %s32, 1
      %p155 = por %p153, %p154
      %p156 = scmp.ne.s32.totalorder %s147, %s148
      %p157 = scmp.eq.s32.totalorder %s32, 0
      %p158 = por %p156, %p157
      %p159 = scmp.ne.s32.totalorder %s147, %s148
      %p160 = scmp.eq.s32.totalorder %s33, 1
      %p161 = por %p159, %p160
      %p163 = scmp.ne.s32.totalorder %s148, %s162
      %p164 = scmp.eq.s32.totalorder %s33, 0
      %p165 = por %p163, %p164
      %s167 = sadd.s32 %s166, 1
      %p170 = scmp.eq.s32.totalorder %s27, 1
      %p171 = scmp.ne.s32.totalorder %s166, %s168
      %p172 = scmp.eq.s32.totalorder %s27, 0
      %p173 = por %p171, %p172
      %p174 = scmp.ne.s32.totalorder %s166, %s168
      %p175 = scmp.eq.s32.totalorder %s32, 1
      %p176 = por %p174, %p175
      %p177 = scmp.ne.s32.totalorder %s168, %s169
      %p178 = scmp.eq.s32.totalorder %s32, 0
      %p179 = por %p177, %p178
      %p180 = scmp.ne.s32.totalorder %s168, %s169
      %p181 = scmp.eq.s32.totalorder %s33, 1
      %p182 = por %p180, %p181
      %p184 = scmp.ne.s32.totalorder %s169, %s183
      %p185 = scmp.eq.s32.totalorder %s33, 0
      %p186 = por %p184, %p185
      %s187 = ssub.s32 %s27, %s34
      %p188 = scmp.eq.s32.totalorder %s187, 0
      %s190 = sadd.s32 %s189, 1
      %s191 = scalar_select %p188, %s189, %s190
      %p194 = pneg %p188
      %p195 = scmp.eq.s32.totalorder %s27, 1
      %p196 = por %p194, %p195
      %p197 = scmp.ne.s32.totalorder %s189, %s192
      %p198 = scmp.eq.s32.totalorder %s27, 0
      %p199 = por %p197, %p198
      %p200 = scmp.ne.s32.totalorder %s189, %s192
      %p201 = scmp.eq.s32.totalorder %s32, 1
      %p202 = por %p200, %p201
      %p203 = scmp.ne.s32.totalorder %s192, %s193
      %p204 = scmp.eq.s32.totalorder %s32, 0
      %p205 = por %p203, %p204
      %p206 = scmp.ne.s32.totalorder %s192, %s193
      %p207 = scmp.eq.s32.totalorder %s33, 1
      %p208 = por %p206, %p207
      %p210 = scmp.ne.s32.totalorder %s193, %s209
      %p211 = scmp.eq.s32.totalorder %s33, 0
      %p212 = por %p210, %p211
      %s213 = ssub.s32 %s27, %s34
      %p214 = scmp.eq.s32.totalorder %s213, 0
      %s216 = sadd.s32 %s215, 1
      %s217 = scalar_select %p214, %s215, %s216
      %p220 = pneg %p214
      %p221 = scmp.eq.s32.totalorder %s27, 1
      %p222 = por %p220, %p221
      %p223 = scmp.ne.s32.totalorder %s215, %s218
      %p224 = scmp.eq.s32.totalorder %s27, 0
      %p225 = por %p223, %p224
      %p226 = scmp.ne.s32.totalorder %s215, %s218
      %p227 = scmp.eq.s32.totalorder %s32, 1
      %p228 = por %p226, %p227
      %p229 = scmp.ne.s32.totalorder %s218, %s219
      %p230 = scmp.eq.s32.totalorder %s32, 0
      %p231 = por %p229, %p230
      %p232 = scmp.ne.s32.totalorder %s218, %s219
      %p233 = scmp.eq.s32.totalorder %s33, 1
      %p234 = por %p232, %p233
      %p236 = scmp.ne.s32.totalorder %s219, %s235
      %p237 = scmp.eq.s32.totalorder %s33, 0
      %p238 = por %p236, %p237
      %s239 = ssub.s32 %s27, %s34
      %p240 = scmp.eq.s32.totalorder %s239, 0
      %s242 = sadd.s32 %s241, 1
      %s243 = scalar_select %p240, %s241, %s242
      %p246 = pneg %p240
      %p247 = scmp.eq.s32.totalorder %s27, 1
      %p248 = por %p246, %p247
      %p249 = scmp.ne.s32.totalorder %s241, %s244
      %p250 = scmp.eq.s32.totalorder %s27, 0
      %p251 = por %p249, %p250
      %p252 = scmp.ne.s32.totalorder %s241, %s244
      %p253 = scmp.eq.s32.totalorder %s32, 1
      %p254 = por %p252, %p253
      %p255 = scmp.ne.s32.totalorder %s244, %s245
      %p256 = scmp.eq.s32.totalorder %s32, 0
      %p257 = por %p255, %p256
      %p258 = scmp.ne.s32.totalorder %s244, %s245
      %p259 = scmp.eq.s32.totalorder %s33, 1
      %p260 = por %p258, %p259
      %p262 = scmp.ne.s32.totalorder %s245, %s261
      %p263 = scmp.eq.s32.totalorder %s33, 0
      %p264 = por %p262, %p263
      %p265 = scmp.le.s32.totalorder 1, %s27
      %p266 = scmp.lt.s32.totalorder %s27, 3
      %p267 = pnand %p265, %p266
      %p268 = pneg %p267
      // Predicated region
      $region9: #{tpu_custom_call.1} parent=5 // pred_check
        _
      $region10: #{tpu_custom_call.1} parent=5 // pred_check_branch
        %270 = sbr.rel (%p267) target = $region12
      $region11: #{tpu_custom_call.1} parent=5 // pred_region
        %s271 = ssub.s32 %s27, 1
        // Predicated region
        $region13: #{tpu_custom_call.1} parent=11 // pred_check
          %p272 = pneg %p74
        $region14: #{tpu_custom_call.1} parent=11 // pred_check_branch
          %274 = sbr.rel (%p272) target = $region16
        $region15: #{tpu_custom_call.1} parent=11 // pred_region
          %s276 = ssub.s32 512, 512
          %277 = vsyncadd [#allocation6], %s276
          %s278 = sshll.u32 [#allocation5], 4
          %s279 = int_to_ptr.vmem [resolvable:$true] %s278
          %284 = dma.hbm_to_vmem [thread:$0]  %s1, 512, %s279, [#allocation6], 128, 128, 8
        $region16: #{tpu_custom_call.1} parent=11 // pred_fallthru
          _
        // Predicated region
        $region17: #{tpu_custom_call.1} parent=11 // pred_check
          %p285 = pneg %p95
        $region18: #{tpu_custom_call.1} parent=11 // pred_check_branch
          %287 = sbr.rel (%p285) target = $region20
        $region19: #{tpu_custom_call.1} parent=11 // pred_region
          _
        $region20: #{tpu_custom_call.1} parent=11 // pred_fallthru
          _
        // Predicated region
        $region21: #{tpu_custom_call.1} parent=11 // pred_check
          %p288 = pneg %p116
        $region22: #{tpu_custom_call.1} parent=11 // pred_check_branch
          %290 = sbr.rel (%p288) target = $region24
        $region23: #{tpu_custom_call.1} parent=11 // pred_region
          %s292 = ssub.s32 512, 512
          %293 = vsyncadd [#allocation6], %s292
          %s294 = sshll.u32 [#allocation7], 4
          %s295 = int_to_ptr.vmem [resolvable:$true] %s294
          %300 = dma.hbm_to_vmem [thread:$0]  %s3, 512, %s295, [#allocation6], 128, 128, 8
        $region24: #{tpu_custom_call.1} parent=11 // pred_fallthru
          _
        // Predicated region
        $region25: #{tpu_custom_call.1} parent=11 // pred_check
          %p301 = pneg %p137
        $region26: #{tpu_custom_call.1} parent=11 // pred_check_branch
          %303 = sbr.rel (%p301) target = $region28
        $region27: #{tpu_custom_call.1} parent=11 // pred_region
          _
        $region28: #{tpu_custom_call.1} parent=11 // pred_fallthru
          _
        // Predicated region
        $region29: #{tpu_custom_call.1} parent=11 // pred_check
          %p304 = pneg %p158
        $region30: #{tpu_custom_call.1} parent=11 // pred_check_branch
          %306 = sbr.rel (%p304) target = $region32
        $region31: #{tpu_custom_call.1} parent=11 // pred_region
          %s308 = ssub.s32 512, 512
          %309 = vsyncadd [#allocation9], %s308
          %s310 = sshll.u32 [#allocation8], 4
          %s311 = int_to_ptr.vmem [resolvable:$true] %s310
          %316 = dma.hbm_to_vmem [thread:$0]  %s5, 512, %s311, [#allocation9], 128, 128, 8
        $region32: #{tpu_custom_call.1} parent=11 // pred_fallthru
          _
        // Predicated region
        $region33: #{tpu_custom_call.1} parent=11 // pred_check
          %p317 = pneg %p179
        $region34: #{tpu_custom_call.1} parent=11 // pred_check_branch
          %319 = sbr.rel (%p317) target = $region36
        $region35: #{tpu_custom_call.1} parent=11 // pred_region
          _
        $region36: #{tpu_custom_call.1} parent=11 // pred_fallthru
          _
      $region12: #{tpu_custom_call.1} parent=5 // pred_fallthru
        _
      %p320 = scmp.lt.s32.totalorder %s27, 2
      // Predicated region
      $region37: #{tpu_custom_call.1} parent=5 // pred_check
        %p321 = pneg %p320
      $region38: #{tpu_custom_call.1} parent=5 // pred_check_branch
        %323 = sbr.rel (%p321) target = $region40
      $region39: #{tpu_custom_call.1} parent=5 // pred_region
        // Predicated region
        $region41: #{tpu_custom_call.1} parent=39 // pred_check
          %p324 = pneg %p47
        $region42: #{tpu_custom_call.1} parent=39 // pred_check_branch
          %326 = sbr.rel (%p324) target = $region44
        $region43: #{tpu_custom_call.1} parent=39 // pred_region
          %s327 = sand.u32 %s37, 1
          %s328 = scalar_lea.sflag [#allocation3], %s327
          %s329 = sand.u32 %s37, 1
          %s330 = smul.addr %s329, 16
          %s331 = scalar_lea.vmem [#allocation2], %s330
          %s332 = smul.u32 2, %s27
          %s334 = ssub.s32 256, 256
          %335 = vsyncadd %s328, %s334
          %s336 = smul.addr %s332, 128
          %s337 = scalar_lea.hbm %s0, %s336
          %s338 = sshll.u32 %s331, 4
          %s339 = int_to_ptr.vmem [resolvable:$true] %s338
          %344 = dma.hbm_to_vmem [thread:$0]  %s337, 256, %s339, %s328, 128, 128, 8
        $region44: #{tpu_custom_call.1} parent=39 // pred_fallthru
          _
      $region40: #{tpu_custom_call.1} parent=5 // pred_fallthru
        _
      %p345 = scmp.le.s32.totalorder 1, %s27
      %p346 = scmp.lt.s32.totalorder %s27, 3
      %p347 = pnand %p345, %p346
      %p348 = pneg %p347
      // Predicated region
      $region45: #{tpu_custom_call.1} parent=5 // pred_check
        _
      $region46: #{tpu_custom_call.1} parent=5 // pred_check_branch
        %350 = sbr.rel (%p347) target = $region48
      $region47: #{tpu_custom_call.1} parent=5 // pred_region
        %s351 = ssub.s32 %s27, 1
        %s352 = sand.u32 %s40, 1
        %s353 = scalar_lea.sflag [#allocation3], %s352
        %s354 = sand.u32 %s40, 1
        %s355 = smul.addr %s354, 16
        %s356 = scalar_lea.vmem [#allocation2], %s355
        // Predicated region
        $region49: #{tpu_custom_call.1} parent=47 // pred_check
          %p357 = pneg %p53
        $region50: #{tpu_custom_call.1} parent=47 // pred_check_branch
          %359 = sbr.rel (%p357) target = $region52
        $region51: #{tpu_custom_call.1} parent=47 // pred_region
          %360 = dma.done %s353, 256
        $region52: #{tpu_custom_call.1} parent=47 // pred_fallthru
          _
        // Predicated region
        $region53: #{tpu_custom_call.1} parent=47 // pred_check
          %p361 = pneg %p74
        $region54: #{tpu_custom_call.1} parent=47 // pred_check_branch
          %363 = sbr.rel (%p361) target = $region56
        $region55: #{tpu_custom_call.1} parent=47 // pred_region
          %364 = dma.done [#allocation6], 512
        $region56: #{tpu_custom_call.1} parent=47 // pred_fallthru
          _
        // Predicated region
        $region57: #{tpu_custom_call.1} parent=47 // pred_check
          %p365 = pneg %p116
        $region58: #{tpu_custom_call.1} parent=47 // pred_check_branch
          %367 = sbr.rel (%p365) target = $region60
        $region59: #{tpu_custom_call.1} parent=47 // pred_region
          %368 = dma.done [#allocation6], 512
        $region60: #{tpu_custom_call.1} parent=47 // pred_fallthru
          _
        // Predicated region
        $region61: #{tpu_custom_call.1} parent=47 // pred_check
          %p369 = pneg %p158
        $region62: #{tpu_custom_call.1} parent=47 // pred_check_branch
          %371 = sbr.rel (%p369) target = $region64
        $region63: #{tpu_custom_call.1} parent=47 // pred_region
          %372 = dma.done [#allocation9], 512
        $region64: #{tpu_custom_call.1} parent=47 // pred_fallthru
          _
        %s373 = sand.u32 %s40, 1
        %s374 = scalar_lea.sflag [#allocation3], %s373
        %s375 = sand.u32 %s40, 1
        %s376 = smul.addr %s375, 16
        %s377 = scalar_lea.vmem [#allocation2], %s376
        %p378 = pneg %p53
        %p379 = pneg %p50
        %p380 = pneg %p74
        %p381 = pneg %p71
        %p382 = pneg %p95
        %p383 = pneg %p92
        %p384 = pneg %p116
        %p385 = pneg %p113
        %p386 = pneg %p137
        %p387 = pneg %p134
        %p388 = pneg %p158
        %p389 = pneg %p155
        %p390 = pneg %p179
        %p391 = pneg %p176
        %p392 = pneg %p205
        %p393 = pneg %p202
        %s394 = sand.u32 %s192, 1
        %s395 = scalar_lea.sflag [#allocation4], %s394
        %s396 = sand.u32 %s192, 1
        %s397 = smul.addr %s396, 8
        %s398 = scalar_lea.vmem [#allocation10], %s397
        %p399 = pneg %p231
        %p400 = pneg %p228
        %s401 = sand.u32 %s32, 1
        %s402 = scalar_lea.sflag [#allocation12], %s401
        %s403 = sand.u32 %s218, 1
        %s404 = smul.addr %s403, 8
        %s405 = scalar_lea.vmem [#allocation11], %s404
        %p406 = pneg %p257
        %p407 = pneg %p254
        %s408 = sand.u32 %s32, 1
        %s409 = scalar_lea.sflag [#allocation12], %s408
        %s410 = sand.u32 %s244, 1
        %s411 = smul.addr %s410, 8
        %s412 = scalar_lea.vmem [#allocation13], %s411
        %s413 = smul.u32 2, %s32
        %s414 = smul.u32 2, %s32
        %s415 = smul.u32 2, %s32
        %s416 = smul.u32 2, %s32
        %v418 = vld [vmem:[%s356] sm:$0xff]
        %v419 = vld [vmem:[%s356 + $0x8] sm:$0xff]
        %v420 = vpack.c.bf16 %v419, %v418
        %v421 = vld [vmem:[#allocation5] sm:$0xff]
        %v422 = vld [vmem:[#allocation5 + $0x8] sm:$0xff]
        %v423 = vld [vmem:[#allocation5 + $0x10] sm:$0xff]
        %v424 = vld [vmem:[#allocation5 + $0x18] sm:$0xff]
        %v425 = vpack.c.bf16 %v422, %v421
        %v426 = vpack.c.bf16 %v424, %v423
        %v427 = vld [vmem:[%s2] sm:$0x1]
        %v429 = vlaneseq
        %v430 = vshrl.u32 %v429, 7
        %v431 = vsub.s32 0, %v430
        %v432 = vrot.slane %v427, %v431
        %vm434 = vcmask 261120
        %v436 = vsel %vm434, %v420, 0
        %438 = vmatprep.subr.bf16.mxu0 0
        %439 = vmatpush1.bf16.msra.mxu0 %v425
        %440 = vmatprep.subr.bf16.mxu0 0
        %441 = vmatpush1.bf16.msra.mxu0 %v426
        %442 = vmatprep.subr.bf16.mxu0 0
        %443 = vmatpush1.bf16.msra.mxu0 0
        %444 = vmatprep.subr.bf16.mxu0 0
        %445 = vmatpush1.bf16.msra.mxu0 0
        %446 = vmatprep.subr.bf16.mxu0 0
        %447 = vmatpush1.bf16.msra.mxu0 0
        %448 = vmatprep.subr.bf16.mxu0 0
        %449 = vmatpush1.bf16.msra.mxu0 0
        %450 = vmatprep.subr.bf16.mxu0 0
        %451 = vmatpush1.bf16.msra.mxu0 0
        %452 = vmatprep.subr.bf16.mxu0 0
        %453 = vmatpush1.bf16.msra.mxu0 0
        %454 = vmatprep.subr.bf16.mxu0 0
        %455 = vmatpush1.bf16.msra.mxu0 0
        %456 = vmatprep.subr.bf16.mxu0 0
        %457 = vmatpush1.bf16.msra.mxu0 0
        %458 = vmatprep.subr.bf16.mxu0 0
        %459 = vmatpush1.bf16.msra.mxu0 0
        %460 = vmatprep.subr.bf16.mxu0 0
        %461 = vmatpush1.bf16.msra.mxu0 0
        %462 = vmatprep.subr.bf16.mxu0 0
        %463 = vmatpush1.bf16.msra.mxu0 0
        %464 = vmatprep.subr.bf16.mxu0 0
        %465 = vmatpush1.bf16.msra.mxu0 0
        %466 = vmatprep.subr.bf16.mxu0 0
        %467 = vmatpush1.bf16.msra.mxu0 0
        %468 = vmatprep.subr.bf16.mxu0 0
        %469 = vmatpush1.bf16.msra.mxu0 0
        %470 = vmatprep.mubr.bf16.mxu0 0
        %471 = vmatmul.mubr.bf16.gmra.mrb[0].mxu0 %v436
        %v472 = vpop.f32.mrb[0].mxu0
        %v473 = vadd.f32 %v432, %v472
        %v474 = vpop.f32.mrb[0].mxu0
        %v475 = vpop.f32.mrb[0].mxu0
        %v476 = vadd.f32 %v432, %v475
        %v477 = vpop.f32.mrb[0].mxu0
        %478 = vdwg.mxu0
        %v479 = vmul.f32 %v473, 0.35355338
        %v480 = vmul.f32 %v476, 0.35355338
        %v481 = vpack.c.bf16 %v480, %v479
        %v483 = vunpack.c.l.b16 %v481
        %v484 = vunpack.c.h.b16 %v481
        %v485 = vpack.c.b16 %v483, %v483
        %v486 = vpack.c.b16 %v484, %v484
        %vm489 = vcmask 257024
        %490 = vst.msk [vmem:[%s398] sm:$0xf] %vm489, %v485
        %491 = vst.msk [vmem:[%s398 + $0x4] sm:$0xf] %vm489, %v486
        %v492 = vld [vmem:[#allocation7] sm:$0xff]
        %v493 = vld [vmem:[#allocation7 + $0x8] sm:$0xff]
        %v494 = vld [vmem:[#allocation7 + $0x10] sm:$0xff]
        %v495 = vld [vmem:[#allocation7 + $0x18] sm:$0xff]
        %v496 = vpack.c.bf16 %v493, %v492
        %v497 = vpack.c.bf16 %v495, %v494
        %v498 = vld [vmem:[%s4] sm:$0x1]
        %v500 = vlaneseq
        %v501 = vshrl.u32 %v500, 7
        %v502 = vsub.s32 0, %v501
        %v503 = vrot.slane %v498, %v502
        %505 = vmatprep.subr.bf16.mxu0 0
        %506 = vmatpush1.bf16.msra.mxu0 %v496
        %507 = vmatprep.subr.bf16.mxu0 0
        %508 = vmatpush1.bf16.msra.mxu0 %v497
        %509 = vmatprep.subr.bf16.mxu0 0
        %510 = vmatpush1.bf16.msra.mxu0 0
        %511 = vmatprep.subr.bf16.mxu0 0
        %512 = vmatpush1.bf16.msra.mxu0 0
        %513 = vmatprep.subr.bf16.mxu0 0
        %514 = vmatpush1.bf16.msra.mxu0 0
        %515 = vmatprep.subr.bf16.mxu0 0
        %516 = vmatpush1.bf16.msra.mxu0 0
        %517 = vmatprep.subr.bf16.mxu0 0
        %518 = vmatpush1.bf16.msra.mxu0 0
        %519 = vmatprep.subr.bf16.mxu0 0
        %520 = vmatpush1.bf16.msra.mxu0 0
        %521 = vmatprep.subr.bf16.mxu0 0
        %522 = vmatpush1.bf16.msra.mxu0 0
        %523 = vmatprep.subr.bf16.mxu0 0
        %524 = vmatpush1.bf16.msra.mxu0 0
        %525 = vmatprep.subr.bf16.mxu0 0
        %526 = vmatpush1.bf16.msra.mxu0 0
        %527 = vmatprep.subr.bf16.mxu0 0
        %528 = vmatpush1.bf16.msra.mxu0 0
        %529 = vmatprep.subr.bf16.mxu0 0
        %530 = vmatpush1.bf16.msra.mxu0 0
        %531 = vmatprep.subr.bf16.mxu0 0
        %532 = vmatpush1.bf16.msra.mxu0 0
        %533 = vmatprep.subr.bf16.mxu0 0
        %534 = vmatpush1.bf16.msra.mxu0 0
        %535 = vmatprep.subr.bf16.mxu0 0
        %536 = vmatpush1.bf16.msra.mxu0 0
        %537 = vmatprep.mubr.bf16.mxu0 0
        %538 = vmatmul.mubr.bf16.gmra.mrb[0].mxu0 %v436
        %v539 = vpop.f32.mrb[0].mxu0
        %v540 = vadd.f32 %v503, %v539
        %v541 = vpop.f32.mrb[0].mxu0
        %v542 = vpop.f32.mrb[0].mxu0
        %v543 = vadd.f32 %v503, %v542
        %v544 = vpop.f32.mrb[0].mxu0
        %545 = vdwg.mxu0
        %v546 = vpack.c.bf16 %v543, %v540
        %v548 = vunpack.c.l.b16 %v546
        %v549 = vunpack.c.h.b16 %v546
        %v550 = vpack.c.b16 %v548, %v548
        %v551 = vpack.c.b16 %v549, %v549
        %554 = vst.msk [vmem:[%s405] sm:$0xf] %vm489, %v550
        %555 = vst.msk [vmem:[%s405 + $0x4] sm:$0xf] %vm489, %v551
        %v556 = vld [vmem:[#allocation8] sm:$0xff]
        %v557 = vld [vmem:[#allocation8 + $0x8] sm:$0xff]
        %v558 = vld [vmem:[#allocation8 + $0x10] sm:$0xff]
        %v559 = vld [vmem:[#allocation8 + $0x18] sm:$0xff]
        %v560 = vpack.c.bf16 %v557, %v556
        %v561 = vpack.c.bf16 %v559, %v558
        %v562 = vld [vmem:[%s6] sm:$0x1]
        %v564 = vlaneseq
        %v565 = vshrl.u32 %v564, 7
        %v566 = vsub.s32 0, %v565
        %v567 = vrot.slane %v562, %v566
        %569 = vmatprep.subr.bf16.mxu0 0
        %570 = vmatpush1.bf16.msra.mxu0 %v560
        %571 = vmatprep.subr.bf16.mxu0 0
        %572 = vmatpush1.bf16.msra.mxu0 %v561
        %573 = vmatprep.subr.bf16.mxu0 0
        %574 = vmatpush1.bf16.msra.mxu0 0
        %575 = vmatprep.subr.bf16.mxu0 0
        %576 = vmatpush1.bf16.msra.mxu0 0
        %577 = vmatprep.subr.bf16.mxu0 0
        %578 = vmatpush1.bf16.msra.mxu0 0
        %579 = vmatprep.subr.bf16.mxu0 0
        %580 = vmatpush1.bf16.msra.mxu0 0
        %581 = vmatprep.subr.bf16.mxu0 0
        %582 = vmatpush1.bf16.msra.mxu0 0
        %583 = vmatprep.subr.bf16.mxu0 0
        %584 = vmatpush1.bf16.msra.mxu0 0
        %585 = vmatprep.subr.bf16.mxu0 0
        %586 = vmatpush1.bf16.msra.mxu0 0
        %587 = vmatprep.subr.bf16.mxu0 0
        %588 = vmatpush1.bf16.msra.mxu0 0
        %589 = vmatprep.subr.bf16.mxu0 0
        %590 = vmatpush1.bf16.msra.mxu0 0
        %591 = vmatprep.subr.bf16.mxu0 0
        %592 = vmatpush1.bf16.msra.mxu0 0
        %593 = vmatprep.subr.bf16.mxu0 0
        %594 = vmatpush1.bf16.msra.mxu0 0
        %595 = vmatprep.subr.bf16.mxu0 0
        %596 = vmatpush1.bf16.msra.mxu0 0
        %597 = vmatprep.subr.bf16.mxu0 0
        %598 = vmatpush1.bf16.msra.mxu0 0
        %599 = vmatprep.subr.bf16.mxu0 0
        %600 = vmatpush1.bf16.msra.mxu0 0
        %601 = vmatprep.mubr.bf16.mxu0 0
        %602 = vmatmul.mubr.bf16.gmra.mrb[0].mxu0 %v436
        %v603 = vpop.f32.mrb[0].mxu0
        %v604 = vadd.f32 %v567, %v603
        %v605 = vpop.f32.mrb[0].mxu0
        %v606 = vpop.f32.mrb[0].mxu0
        %v607 = vadd.f32 %v567, %v606
        %v608 = vpop.f32.mrb[0].mxu0
        %609 = vdwg.mxu0
        %v610 = vpack.c.bf16 %v607, %v604
        %v612 = vunpack.c.l.b16 %v610
        %v613 = vunpack.c.h.b16 %v610
        %v614 = vpack.c.b16 %v612, %v612
        %v615 = vpack.c.b16 %v613, %v613
        %618 = vst.msk [vmem:[%s412] sm:$0xf] %vm489, %v614
        %619 = vst.msk [vmem:[%s412 + $0x4] sm:$0xf] %vm489, %v615
        %s620 = sand.u32 %s192, 1
        %s621 = scalar_lea.sflag [#allocation4], %s620
        %s622 = sand.u32 %s192, 1
        %s623 = smul.addr %s622, 8
        %s624 = scalar_lea.vmem [#allocation10], %s623
        %s625 = sand.u32 %s32, 1
        %s626 = scalar_lea.sflag [#allocation12], %s625
        %s627 = sand.u32 %s218, 1
        %s628 = smul.addr %s627, 8
        %s629 = scalar_lea.vmem [#allocation11], %s628
        %s630 = sand.u32 %s32, 1
        %s631 = scalar_lea.sflag [#allocation12], %s630
        %s632 = sand.u32 %s244, 1
        %s633 = smul.addr %s632, 8
        %s634 = scalar_lea.vmem [#allocation13], %s633
        // Predicated region
        $region65: #{tpu_custom_call.1} parent=47 // pred_check
          %p635 = pneg %p202
        $region66: #{tpu_custom_call.1} parent=47 // pred_check_branch
          %637 = sbr.rel (%p635) target = $region68
        $region67: #{tpu_custom_call.1} parent=47 // pred_region
          %s638 = smul.u32 2, %s32
          %s640 = ssub.s32 128, 128
          %641 = vsyncadd %s621, %s640
          %s642 = smul.addr %s638, 64
          %s643 = scalar_lea.hbm %s7, %s642
          %s644 = sshll.u32 %s624, 4
          %s645 = int_to_ptr.vmem [resolvable:$true] %s644
          %650 = dma.vmem_to_hbm [thread:$0]  %s645, 128, %s643, %s621, 64, 64, 4
        $region68: #{tpu_custom_call.1} parent=47 // pred_fallthru
          _
        // Predicated region
        $region69: #{tpu_custom_call.1} parent=47 // pred_check
          %p651 = pneg %p228
        $region70: #{tpu_custom_call.1} parent=47 // pred_check_branch
          %653 = sbr.rel (%p651) target = $region72
        $region71: #{tpu_custom_call.1} parent=47 // pred_region
          %s654 = smul.u32 2, %s32
          %s656 = ssub.s32 128, 128
          %657 = vsyncadd %s626, %s656
          %s658 = smul.addr %s654, 64
          %s659 = scalar_lea.hbm %s8, %s658
          %s660 = sshll.u32 %s629, 4
          %s661 = int_to_ptr.vmem [resolvable:$true] %s660
          %666 = dma.vmem_to_hbm [thread:$0]  %s661, 128, %s659, %s626, 64, 64, 4
        $region72: #{tpu_custom_call.1} parent=47 // pred_fallthru
          _
        // Predicated region
        $region73: #{tpu_custom_call.1} parent=47 // pred_check
          %p667 = pneg %p254
        $region74: #{tpu_custom_call.1} parent=47 // pred_check_branch
          %669 = sbr.rel (%p667) target = $region76
        $region75: #{tpu_custom_call.1} parent=47 // pred_region
          %s670 = smul.u32 2, %s32
          %s672 = ssub.s32 128, 128
          %673 = vsyncadd %s631, %s672
          %s674 = smul.addr %s670, 64
          %s675 = scalar_lea.hbm %s9, %s674
          %s676 = sshll.u32 %s634, 4
          %s677 = int_to_ptr.vmem [resolvable:$true] %s676
          %682 = dma.vmem_to_hbm [thread:$0]  %s677, 128, %s675, %s631, 64, 64, 4
        $region76: #{tpu_custom_call.1} parent=47 // pred_fallthru
          _
      $region48: #{tpu_custom_call.1} parent=5 // pred_fallthru
        _
      %p683 = scmp.le.s32.totalorder 2, %s27
      // Predicated region
      $region77: #{tpu_custom_call.1} parent=5 // pred_check
        %p684 = pneg %p683
      $region78: #{tpu_custom_call.1} parent=5 // pred_check_branch
        %686 = sbr.rel (%p684) target = $region80
      $region79: #{tpu_custom_call.1} parent=5 // pred_region
        %s687 = ssub.s32 %s27, 2
        // Predicated region
        $region81: #{tpu_custom_call.1} parent=79 // pred_check
          %p688 = pneg %p208
        $region82: #{tpu_custom_call.1} parent=79 // pred_check_branch
          %690 = sbr.rel (%p688) target = $region84
        $region83: #{tpu_custom_call.1} parent=79 // pred_region
          %s691 = sand.u32 %s193, 1
          %s692 = scalar_lea.sflag [#allocation4], %s691
          %s693 = sand.u32 %s193, 1
          %s694 = smul.addr %s693, 8
          %s695 = scalar_lea.vmem [#allocation10], %s694
          %696 = dma.done %s692, 128
        $region84: #{tpu_custom_call.1} parent=79 // pred_fallthru
          _
        // Predicated region
        $region85: #{tpu_custom_call.1} parent=79 // pred_check
          %p697 = pneg %p234
        $region86: #{tpu_custom_call.1} parent=79 // pred_check_branch
          %699 = sbr.rel (%p697) target = $region88
        $region87: #{tpu_custom_call.1} parent=79 // pred_region
          %s700 = sand.u32 %s33, 1
          %s701 = scalar_lea.sflag [#allocation12], %s700
          %s702 = sand.u32 %s219, 1
          %s703 = smul.addr %s702, 8
          %s704 = scalar_lea.vmem [#allocation11], %s703
          %705 = dma.done %s701, 128
        $region88: #{tpu_custom_call.1} parent=79 // pred_fallthru
          _
        // Predicated region
        $region89: #{tpu_custom_call.1} parent=79 // pred_check
          %p706 = pneg %p260
        $region90: #{tpu_custom_call.1} parent=79 // pred_check_branch
          %708 = sbr.rel (%p706) target = $region92
        $region91: #{tpu_custom_call.1} parent=79 // pred_region
          %s709 = sand.u32 %s33, 1
          %s710 = scalar_lea.sflag [#allocation12], %s709
          %s711 = sand.u32 %s245, 1
          %s712 = smul.addr %s711, 8
          %s713 = scalar_lea.vmem [#allocation13], %s712
          %714 = dma.done %s710, 128
        $region92: #{tpu_custom_call.1} parent=79 // pred_fallthru
          _
      $region80: #{tpu_custom_call.1} parent=5 // pred_fallthru
        _
    $region6: #{tpu_custom_call.1} parent=1 // loop_footer
      %s31 = sadd.s32 1, %s27
    $region7: #{tpu_custom_call.1} parent=1 // loop_footer_branch
      %26 = sbr.rel target = $region3
    $region8: #{tpu_custom_call.1} parent=1 // loop_exit
      _
    %715 = vsyncpa [#allocation3], 1
    %s716 = scalar_lea.sflag [#allocation3], 1
    %717 = vsyncpa %s716, 1
    %718 = vsyncpa [#allocation6], 1
    %719 = vsyncpa [#allocation9], 1
    %720 = vsyncpa [#allocation4], 1
    %s721 = scalar_lea.sflag [#allocation4], 1
    %722 = vsyncpa %s721, 1
    %723 = vsyncpa [#allocation12], 1
    %s724 = scalar_lea.sflag [#allocation12], 1
    %725 = vsyncpa %s724, 1

</llo_original>
